<compile_context>
chip_gen: v7x
topology: tpu7x:2x2x1
jax: 0.10.0
libtpu: 0.0.40
codegen_flags: <defaults>
</compile_context>

<pallas_src>
import functools

import jax
import jax.numpy as jnp
from jax import lax
from jax.experimental import pallas as pl
from jax.experimental.pallas import tpu as pltpu

_NEG_BIG = -1e30  # finite "-inf": no NaN even when a row has zero valid tokens


def _ocr_attn_kernel(q_ref, w_ref, b_ref, ocr_ref, nt_ref, out_ref, *, t_chunk):
    # q_ref:   (TB, Dq)       question rows (f32 or bf16)
    # w_ref:   (Dq, Dt)       linear weight, pre-transposed (f32 or bf16)
    # b_ref:   (1, Dt)        linear bias (f32)
    # ocr_ref: (TB, T, Dt)    ocr token features (f32 or bf16)
    # nt_ref:  (TB, 1)        valid-token counts (int32)
    # out_ref: (TB, Dt)       attended features (f32)
    _, t_total, _ = ocr_ref.shape
    ocr_dtype = ocr_ref.dtype

    # ---- Linear projection on the MXU: (TB, Dq) @ (Dq, Dt) + b -> (TB, Dt) f32
    adj = jnp.dot(q_ref[...], w_ref[...],
                  preferred_element_type=jnp.float32) + b_ref[...]

    # Multiplies run in the OCR's native dtype (bf16 VALU on v6e/v7x); all
    # accumulation stays f32.  Hoisted out of the chunk loop (no re-broadcast).
    adj_b = adj.astype(ocr_dtype)[:, None, :]          # (TB, 1, Dt)

    # ---- Scores, accumulated over sublane-aligned T chunks -> (TB, T) f32.
    #      Chunking bounds temporaries at (TB, t_chunk, Dt) instead of the full
    #      OCR block (the review's main VMEM / spill concern).
    score_chunks = []
    for c in range(0, t_total, t_chunk):
        ocr_c = ocr_ref[:, c:c + t_chunk, :]            # static slice, native dtype
        score_chunks.append(
            jnp.sum(adj_b * ocr_c, axis=2, dtype=jnp.float32))
    pre = (jnp.concatenate(score_chunks, axis=1)
           if len(score_chunks) > 1 else score_chunks[0])   # (TB, T)

    # ---- Length mask: positions >= num_tokens[b] get a huge finite negative.
    nt = nt_ref[...]                                     # (TB, 1) int32
    tok = lax.broadcasted_iota(jnp.int32, pre.shape, 1)  # (TB, T)
    pre = jnp.where(tok < nt, pre, _NEG_BIG)

    # ---- Softmax over the token axis (exact normalization).
    m = jnp.max(pre, axis=1, keepdims=True)
    e = jnp.exp(pre - m)
    weights = e / jnp.sum(e, axis=1, keepdims=True)
    # Zero-token rows (incl. batch-padding rows): output 0 instead of garbage.
    weights = jnp.where(nt > 0, weights, 0.0)
    w_att = weights.astype(ocr_dtype)                    # bf16 multiply on v6e/v7x

    # ---- Readout: accumulate over the same T chunks -> (TB, Dt) f32.
    acc = jnp.zeros(out_ref.shape, jnp.float32)
    for c in range(0, t_total, t_chunk):
        ocr_c = ocr_ref[:, c:c + t_chunk, :]
        acc = acc + jnp.sum(w_att[:, c:c + t_chunk, None] * ocr_c,
                            axis=1, dtype=jnp.float32)
    out_ref[...] = acc


def _round_up(x, m):
    return -(-x // m) * m


def _invariant_spec(shape):
    """Grid-invariant operand: fetched once; single-buffered to reclaim VMEM."""
    index_map = lambda i: (0,) * len(shape)
    try:
        return pl.BlockSpec(shape, index_map, pipeline_mode=pl.Buffered(1))
    except (AttributeError, TypeError):      # older jax: fall back to default
        return pl.BlockSpec(shape, index_map)


def ocr_tokens_and_text(question_feat, ocr_token_feats, num_tokens,
                        weight, bias, *, tb=None):
    """question_feat: (B, Dq); ocr_token_feats: (B, T, Dt); num_tokens: (B,) int;
    weight: (Dq, Dt) = nn.Linear weight pre-transposed; bias: (Dt,).
    Inputs may be f32 or bf16 (bf16 must come from the producer; the wrapper
    never casts f32 -> bf16, which would add an extra HBM round trip).
    Returns (B, Dt) float32."""
    B, Dq = question_feat.shape
    _, T, Dt = ocr_token_feats.shape
    assert weight.shape == (Dq, Dt) and bias.shape == (Dt,)

    ocr_dtype = ocr_token_feats.dtype
    ocr_bytes = jnp.dtype(ocr_dtype).itemsize
    q_bytes = jnp.dtype(question_feat.dtype).itemsize
    w_bytes = jnp.dtype(weight.dtype).itemsize

    # ---- Pad T to a sublane multiple (8 f32 / 16 bf16) and Dt to a lane
    #      multiple (128) so output stores are lane-dense (full vst).
    sub = 8 if ocr_bytes >= 4 else 16
    t_p, dt_p = _round_up(T, sub), _round_up(Dt, 128)
    if (t_p, dt_p) != (T, Dt):
        ocr_token_feats = jnp.pad(ocr_token_feats,
                                  ((0, 0), (0, t_p - T), (0, dt_p - Dt)))
    if dt_p != Dt:
        weight = jnp.pad(weight, ((0, 0), (0, dt_p - Dt)))
        bias = jnp.pad(bias, (0, dt_p - Dt))

    # ---- VMEM budget (generation aware: 64 MiB/TC on v7x vs 128 MiB v5e/v6e).
    try:
        vmem_cap = int(pltpu.get_tpu_info().vmem_capacity_bytes)
    except Exception:
        vmem_cap = 64 << 20                     # conservative (v7x per-TC)
    vmem_limit = min(vmem_cap // 2, 64 << 20)
    budget = (vmem_limit * 3) // 4              # headroom for in-kernel temps

    b8 = _round_up(B, 8)
    if tb is None:
        fixed = Dq * dt_p * w_bytes + dt_p * 4  # single-buffered weight + bias
        def blk_bytes(t):                       # double-buffered per-step blocks
            return 2 * (t * t_p * dt_p * ocr_bytes + t * Dq * q_bytes
                        + t * 4 + t * dt_p * 4)
        tb = min(128, b8)
        while tb > 8 and fixed + blk_bytes(tb) > budget:
            tb -= 8
        # Ensure >= 2 grid steps so ("parallel",) actually spans both TCs (v7x).
        if b8 >= 16:
            tb = min(tb, _round_up(-(-b8 // 2), 8))
    tb = max(8, _round_up(tb, 8))
    n_blocks = -(-B // tb)
    b_p = n_blocks * tb

    if b_p != B:
        pad = b_p - B
        question_feat = jnp.pad(question_feat, ((0, pad), (0, 0)))
        ocr_token_feats = jnp.pad(ocr_token_feats, ((0, pad), (0, 0), (0, 0)))
        num_tokens = jnp.pad(num_tokens, (0, pad))      # padded rows: 0 tokens

    nt2d = num_tokens.astype(jnp.int32).reshape(b_p, 1)
    bias2d = bias.astype(jnp.float32).reshape(1, dt_p)

    kernel = functools.partial(_ocr_attn_kernel, t_chunk=sub)

    grid_spec = pltpu.PrefetchScalarGridSpec(
        num_scalar_prefetch=0,
        grid=(n_blocks,),
        in_specs=[
            pl.BlockSpec((tb, Dq), lambda i: (i, 0)),          # question tile
            _invariant_spec((Dq, dt_p)),                       # weight (invariant)
            _invariant_spec((1, dt_p)),                        # bias   (invariant)
            # TODO(synk): on v5e/v6e there is VMEM room for pl.Buffered(3) on the
            # OCR input; for very large T add a second "arbitrary" grid axis over
            # T with an online-softmax accumulator instead of shrinking tb.
            pl.BlockSpec((tb, t_p, dt_p), lambda i: (i, 0, 0)),  # ocr tile
            pl.BlockSpec((tb, 1), lambda i: (i, 0)),             # num_tokens tile
        ],
        out_specs=pl.BlockSpec((tb, dt_p), lambda i: (i, 0)),
    )

    out = pl.pallas_call(
        kernel,
        out_shape=jax.ShapeDtypeStruct((b_p, dt_p), jnp.float32),
        grid_spec=grid_spec,
        compiler_params=pltpu.CompilerParams(
            dimension_semantics=("parallel",),
            vmem_limit_bytes=int(vmem_limit)),
    )(question_feat, weight, bias2d, ocr_token_feats, nt2d)

    return out[:B, :Dt]


def _reference(question_feat, ocr_token_feats, num_tokens, weight, bias):
    """Pure-JAX reference (f32, HIGHEST matmul precision so TPU's default bf16
    matmul passes don't pollute the comparison — this was the prior mismatch)."""
    q = question_feat.astype(jnp.float32)
    ocr = ocr_token_feats.astype(jnp.float32)
    w = weight.astype(jnp.float32)
    adj = jnp.dot(q, w, precision=jax.lax.Precision.HIGHEST) + bias.astype(jnp.float32)
    pre = jnp.sum(adj[:, None, :] * ocr, axis=2)
    t = ocr.shape[1]
    mask = jnp.arange(t)[None, :] < num_tokens[:, None]
    pre = jnp.where(mask, pre, -jnp.inf)
    wts = jax.nn.softmax(pre, axis=1)
    return jnp.einsum("bt,btd->bd", wts, ocr,
                      precision=jax.lax.Precision.HIGHEST)


if __name__ == "__main__":
    # Small shapes; Dt=50 matches the module's default ocr_token_dim and
    # exercises the Dt->128 lane padding and T->sublane padding paths.
    B, Dq, T, Dt = 10, 128, 12, 50

    key = jax.random.PRNGKey(0)
    k_q, k_ocr, k_w, k_b, k_n = jax.random.split(key, 5)

    question_feat = jax.random.normal(k_q, (B, Dq), jnp.float32)
    ocr_token_feats = jax.random.normal(k_ocr, (B, T, Dt), jnp.float32)
    num_tokens = jax.random.randint(k_n, (B,), 1, T + 1).astype(jnp.int32)

    # nn.Linear(question_dim, ocr_token_dim) equivalent: weight stored
    # pre-transposed as (Dq, Dt), bias (Dt,).
    bound = 1.0 / (Dq ** 0.5)
    weight = jax.random.uniform(k_w, (Dq, Dt), jnp.float32, -bound, bound)
    bias = jax.random.uniform(k_b, (Dt,), jnp.float32, -bound, bound)

    ref = _reference(question_feat, ocr_token_feats, num_tokens, weight, bias)

    # 1) f32, auto tile (>= 2 grid steps -> both v7x TCs; batch/T/Dt padding).
    out = jax.block_until_ready(
        ocr_tokens_and_text(question_feat, ocr_token_feats, num_tokens,
                            weight, bias))
    assert out.shape == (B, Dt)
    assert jnp.allclose(out, ref, atol=2e-3, rtol=2e-3), "f32 mismatch"

    # 2) f32, explicit tile -> single grid step path.
    out_1blk = jax.block_until_ready(
        ocr_tokens_and_text(question_feat, ocr_token_feats, num_tokens,
                            weight, bias, tb=16))
    assert jnp.allclose(out_1blk, ref, atol=2e-3, rtol=2e-3), "f32 tb=16 mismatch"

    # 3) bf16 supplied by the producer (no wrapper-side cast); f32 accumulation.
    q_bf = question_feat.astype(jnp.bfloat16)
    ocr_bf = ocr_token_feats.astype(jnp.bfloat16)
    w_bf = weight.astype(jnp.bfloat16)
    ref_bf = _reference(q_bf, ocr_bf, num_tokens, w_bf, bias)
    out_bf = jax.block_until_ready(
        ocr_tokens_and_text(q_bf, ocr_bf, num_tokens, w_bf, bias))
    assert jnp.allclose(out_bf, ref_bf, atol=1e-1, rtol=1e-1), "bf16 mismatch"

    print("KERNEL_OK")
</pallas_src>

<mosaic_0001>
module attributes {stable_mosaic.version = 11 : i64} {
  func.func @_ocr_attn_kernel(%arg0: i32, %arg1: memref<8x128xf32, #tpu.memory_space<vmem>>, %arg2: memref<128x128xf32, #tpu.memory_space<vmem>>, %arg3: memref<1x128xf32, #tpu.memory_space<vmem>>, %arg4: memref<8x16x128xf32, #tpu.memory_space<vmem>>, %arg5: memref<8x1xi32, #tpu.memory_space<vmem>>, %arg6: memref<8x128xf32, #tpu.memory_space<vmem>>) attributes {dimension_semantics = [#tpu.dimension_semantics<parallel>], iteration_bounds = array<i64: 2>, scalar_prefetch = 0 : i64, scratch_operands = 0 : i64, tpu.core_type = #tpu.core_type<tc>, window_params = [{transform_indices = @transform_0, window_bounds = array<i64: 8, 128>}, {pipeline_mode = #tpu.pipeline_mode<synchronous>, transform_indices = @transform_1, window_bounds = array<i64: 128, 128>}, {pipeline_mode = #tpu.pipeline_mode<synchronous>, transform_indices = @transform_2, window_bounds = array<i64: 1, 128>}, {transform_indices = @transform_3, window_bounds = array<i64: 8, 16, 128>}, {transform_indices = @transform_4, window_bounds = array<i64: 8, 1>}, {transform_indices = @transform_5, window_bounds = array<i64: 8, 128>}]} {
    %c0 = arith.constant 0 : index
    %c0_0 = arith.constant 0 : index
    %0 = vector.load %arg1[%c0, %c0_0] : memref<8x128xf32, #tpu.memory_space<vmem>>, vector<8x128xf32>
    %c0_1 = arith.constant 0 : index
    %c0_2 = arith.constant 0 : index
    %1 = vector.load %arg2[%c0_1, %c0_2] : memref<128x128xf32, #tpu.memory_space<vmem>>, vector<128x128xf32>
    %cst = arith.constant dense<0.000000e+00> : vector<8x128xf32>
    %2 = tpu.matmul %0, %1, %cst {dimension_numbers = #tpu.dot_dimension_numbers<[1], [0], [0], [1], [0, 0, 1, 1], [], []>} : vector<8x128xf32>, vector<128x128xf32>, vector<8x128xf32> -> vector<8x128xf32>
    %c0_3 = arith.constant 0 : index
    %c0_4 = arith.constant 0 : index
    %3 = vector.load %arg3[%c0_3, %c0_4] : memref<1x128xf32, #tpu.memory_space<vmem>>, vector<1x128xf32>
    %4 = vector.broadcast %3 : vector<1x128xf32> to vector<8x128xf32>
    %5 = arith.addf %2, %4 : vector<8x128xf32>
    %6 = vector.shape_cast %5 : vector<8x128xf32> to vector<8x1x128xf32>
    %c0_5 = arith.constant 0 : index
    %c0_6 = arith.constant 0 : index
    %c0_7 = arith.constant 0 : index
    %7 = vector.load %arg4[%c0_5, %c0_6, %c0_7] : memref<8x16x128xf32, #tpu.memory_space<vmem>>, vector<8x8x128xf32>
    %8 = vector.broadcast %6 : vector<8x1x128xf32> to vector<8x8x128xf32>
    %9 = arith.mulf %8, %7 : vector<8x8x128xf32>
    %cst_8 = arith.constant dense<0.000000e+00> : vector<8x8xf32>
    %10 = vector.multi_reduction <add>, %9, %cst_8 [2] : vector<8x8x128xf32> to vector<8x8xf32>
    %c0_9 = arith.constant 0 : index
    %c8 = arith.constant 8 : index
    %c0_10 = arith.constant 0 : index
    %11 = vector.load %arg4[%c0_9, %c8, %c0_10] : memref<8x16x128xf32, #tpu.memory_space<vmem>>, vector<8x8x128xf32>
    %12 = vector.broadcast %6 : vector<8x1x128xf32> to vector<8x8x128xf32>
    %13 = arith.mulf %12, %11 : vector<8x8x128xf32>
    %cst_11 = arith.constant dense<0.000000e+00> : vector<8x8xf32>
    %14 = vector.multi_reduction <add>, %13, %cst_11 [2] : vector<8x8x128xf32> to vector<8x8xf32>
    %15 = tpu.concatenate %10, %14 in 1 : vector<8x8xf32>, vector<8x8xf32> -> vector<8x16xf32>
    %c0_12 = arith.constant 0 : index
    %c0_13 = arith.constant 0 : index
    %16 = vector.load %arg5[%c0_12, %c0_13] : memref<8x1xi32, #tpu.memory_space<vmem>>, vector<8x1xi32>
    %17 = tpu.iota {dimensions = array<i32: 1>} : vector<8x16xi32>
    %18 = vector.broadcast %16 : vector<8x1xi32> to vector<8x16xi32>
    %19 = arith.cmpi slt, %17, %18 : vector<8x16xi32>
    %cst_14 = arith.constant -1.000000e+30 : f32
    %20 = vector.broadcast %cst_14 : f32 to vector<8x16xf32>
    %21 = arith.select %19, %15, %20 : vector<8x16xi1>, vector<8x16xf32>
    %cst_15 = arith.constant dense<0xFF800000> : vector<8xf32>
    %22 = vector.multi_reduction <maximumf>, %21, %cst_15 [1] : vector<8x16xf32> to vector<8xf32>
    %23 = vector.shape_cast %22 : vector<8xf32> to vector<8x1xf32>
    %24 = vector.broadcast %23 : vector<8x1xf32> to vector<8x16xf32>
    %25 = arith.subf %21, %24 : vector<8x16xf32>
    %26 = math.exp %25 : vector<8x16xf32>
    %cst_16 = arith.constant dense<0.000000e+00> : vector<8xf32>
    %27 = vector.multi_reduction <add>, %26, %cst_16 [1] : vector<8x16xf32> to vector<8xf32>
    %28 = vector.shape_cast %27 : vector<8xf32> to vector<8x1xf32>
    %29 = vector.broadcast %28 : vector<8x1xf32> to vector<8x16xf32>
    %30 = arith.divf %26, %29 : vector<8x16xf32>
    %c0_i32 = arith.constant 0 : i32
    %31 = vector.broadcast %c0_i32 : i32 to vector<8x1xi32>
    %32 = arith.cmpi sgt, %16, %31 : vector<8x1xi32>
    %cst_17 = arith.constant 0.000000e+00 : f32
    %33 = vector.shape_cast %32 : vector<8x1xi1> to vector<8x1xi1>
    %34 = vector.broadcast %33 : vector<8x1xi1> to vector<8x16xi1>
    %35 = vector.broadcast %cst_17 : f32 to vector<8x16xf32>
    %36 = arith.select %34, %30, %35 : vector<8x16xi1>, vector<8x16xf32>
    %cst_18 = arith.constant 0.000000e+00 : f32
    %37 = vector.broadcast %cst_18 : f32 to vector<8x128xf32>
    %c0_19 = arith.constant 0 : index
    %c0_20 = arith.constant 0 : index
    %c0_21 = arith.constant 0 : index
    %38 = vector.load %arg4[%c0_19, %c0_20, %c0_21] : memref<8x16x128xf32, #tpu.memory_space<vmem>>, vector<8x8x128xf32>
    %39 = vector.extract_strided_slice %36 {offsets = [0, 0], sizes = [8, 8], strides = [1, 1]} : vector<8x16xf32> to vector<8x8xf32>
    %40 = vector.shape_cast %39 : vector<8x8xf32> to vector<8x8x1xf32>
    %41 = vector.broadcast %40 : vector<8x8x1xf32> to vector<8x8x128xf32>
    %42 = arith.mulf %41, %38 : vector<8x8x128xf32>
    %cst_22 = arith.constant dense<0.000000e+00> : vector<8x128xf32>
    %43 = vector.multi_reduction <add>, %42, %cst_22 [1] : vector<8x8x128xf32> to vector<8x128xf32>
    %44 = arith.addf %37, %43 : vector<8x128xf32>
    %c0_23 = arith.constant 0 : index
    %c8_24 = arith.constant 8 : index
    %c0_25 = arith.constant 0 : index
    %45 = vector.load %arg4[%c0_23, %c8_24, %c0_25] : memref<8x16x128xf32, #tpu.memory_space<vmem>>, vector<8x8x128xf32>
    %46 = vector.extract_strided_slice %36 {offsets = [0, 8], sizes = [8, 8], strides = [1, 1]} : vector<8x16xf32> to vector<8x8xf32>
    %47 = vector.shape_cast %46 : vector<8x8xf32> to vector<8x8x1xf32>
    %48 = vector.broadcast %47 : vector<8x8x1xf32> to vector<8x8x128xf32>
    %49 = arith.mulf %48, %45 : vector<8x8x128xf32>
    %cst_26 = arith.constant dense<0.000000e+00> : vector<8x128xf32>
    %50 = vector.multi_reduction <add>, %49, %cst_26 [1] : vector<8x8x128xf32> to vector<8x128xf32>
    %51 = arith.addf %44, %50 : vector<8x128xf32>
    %c0_27 = arith.constant 0 : index
    %c0_28 = arith.constant 0 : index
    %52 = vector.load %arg6[%c0_27, %c0_28] : memref<8x128xf32, #tpu.memory_space<vmem>>, vector<8x128xf32>
    tpu.vector_store %arg6[%c0_27, %c0_28], %51 {strides = array<i32>} : memref<8x128xf32, #tpu.memory_space<vmem>>, vector<8x128xf32>,
    return
  }
  func.func @transform_0(%arg0: i32) -> (i32, i32) {
    %c0_i32 = arith.constant 0 : i32
    %c0_i32_0 = arith.constant 0 : i32
    return %arg0, %c0_i32 : i32, i32
  }
  func.func @transform_1(%arg0: i32) -> (i32, i32) {
    %c0_i32 = arith.constant 0 : i32
    %c0_i32_0 = arith.constant 0 : i32
    %c0_i32_1 = arith.constant 0 : i32
    return %c0_i32, %c0_i32_0 : i32, i32
  }
  func.func @transform_2(%arg0: i32) -> (i32, i32) {
    %c0_i32 = arith.constant 0 : i32
    %c0_i32_0 = arith.constant 0 : i32
    %c0_i32_1 = arith.constant 0 : i32
    return %c0_i32, %c0_i32_0 : i32, i32
  }
  func.func @transform_3(%arg0: i32) -> (i32, i32, i32) {
    %c0_i32 = arith.constant 0 : i32
    %c0_i32_0 = arith.constant 0 : i32
    %c0_i32_1 = arith.constant 0 : i32
    return %arg0, %c0_i32, %c0_i32_0 : i32, i32, i32
  }
  func.func @transform_4(%arg0: i32) -> (i32, i32) {
    %c0_i32 = arith.constant 0 : i32
    %c0_i32_0 = arith.constant 0 : i32
    return %arg0, %c0_i32 : i32, i32
  }
  func.func @transform_5(%arg0: i32) -> (i32, i32) {
    %c0_i32 = arith.constant 0 : i32
    %c0_i32_0 = arith.constant 0 : i32
    return %arg0, %c0_i32 : i32, i32
  }
}

</mosaic_0001>

<llo_original>
// kernel: tpu_custom_call.1
$region0: #{tpu_custom_call.1}
  #allocation0 [shape = 'u32[]', space=smem, size = 0x4, offset = 0x4, fixed_abs, tag = 'smem constant byte address 0x4 - core index']
  #allocation1 [shape = 'u32[144,128]{1,0:T(1,128)}', space=vmem, size = 0x12000, scoped, tag = 'internal scratch']
  %s0 = inlined_call_operand.vmem [shape: f32[16,128], index: 0, kind: input, shape index: {}]
  %s1 = inlined_call_operand.hbm [shape: f32[128,128], index: 1, kind: input, shape index: {}]
  %s2 = inlined_call_operand.vmem [shape: f32[1,128], index: 2, kind: input, shape index: {}]
  %s3 = inlined_call_operand.hbm [shape: f32[16,16,128], index: 3, kind: input, shape index: {}]
  %s4 = inlined_call_operand.vmem [shape: s32[16,1], index: 4, kind: input, shape index: {}]
  %s5 = inlined_call_operand.hbm [shape: f32[16,128], index: 5, kind: output, shape index: {}]
  %s6 = sld [smem:[#allocation0]]
  $region61: #{tpu_custom_call.1} parent=0
    _
  %s8 = ssub.s32 1, %s6
  %s9 = scalar_select 0, %s8, %s6
  $region1: #{tpu_custom_call.1} parent=0
    #allocation2 [shape = 'u8[65536]{0}', space=vmem, size = 0x10000, scoped, tag = 'input window, operand 1, single buffered']
    #allocation3 [shape = 's32[2]{0}', space=sflag, size = 0x8, scoped, tag = 'scoped memory for tpu_custom_call.1']
    #allocation4 [shape = 's32[2]{0}', space=sflag, size = 0x8, scoped, tag = 'scoped memory for tpu_custom_call.1']
    #allocation5 [shape = 'u8[131072]{0}', space=vmem, size = 0x20000, scoped, tag = 'input window, operand 3']
    #allocation6 [shape = 's32[2]{0}', space=sflag, size = 0x8, scoped, tag = 'scoped memory for tpu_custom_call.1']
    #allocation7 [shape = 'u8[8192]{0}', space=vmem, size = 0x2000, scoped, tag = 'output window, operand 0']
    %10 = vsyncpa [#allocation3], 0
    %11 = vsyncpa [#allocation6], 0
    %s12 = scalar_lea.sflag [#allocation6], 1
    %13 = vsyncpa %s12, 0
    %14 = vsyncpa [#allocation4], 0
    %s15 = scalar_lea.sflag [#allocation4], 1
    %16 = vsyncpa %s15, 0
    loop: start=0, step=1, limit=4
    $region2: #{tpu_custom_call.1} parent=1 // loop_pre_header
      _
    $region3: #{tpu_custom_call.1} parent=1 // loop_header
      %s18 = sphi 0, %s22
      %p19 = scmp.ge.s32.totalorder %s18, 4
      %s28 = sphi 0, %s30
      %s31 = sphi 0, %s28
      %s32 = sphi 0, %s31
      %s48 = sphi 0, %s32
      %s52 = sphi 0, %s52
      %s54 = sphi 0, %s52
      %s55 = sphi 0, %s54
      %s69 = sphi 0, %s55
      %s73 = sphi 0, %s73
      %s75 = sphi 0, %s73
      %s76 = sphi 0, %s75
      %s90 = sphi 0, %s76
      %s96 = sphi 0, %s98
      %s99 = sphi 0, %s96
      %s100 = sphi 0, %s99
      %s116 = sphi 0, %s100
      %s122 = sphi 0, %s124
      %s125 = sphi 0, %s122
      %s126 = sphi 0, %s125
      %s142 = sphi 0, %s126
      %s148 = sphi 0, %s150
      %s151 = sphi 0, %s148
      %s152 = sphi 0, %s151
      %s168 = sphi 0, %s152
    $region4: #{tpu_custom_call.1} parent=1 // loop_header_branch
      %21 = sbr.rel (%p19) target = $region8
    $region5: #{tpu_custom_call.1} parent=1 // loop_body
      %s23 = ssub.s32 %s18, 1
      %s24 = ssub.s32 %s18, 2
      %s25 = sadd.s32 %s18, 1
      %s26 = ssub.s32 %s18, %s25
      %p27 = scmp.eq.s32.totalorder %s26, 0
      %s29 = sadd.s32 %s28, 1
      %s30 = scalar_select %p27, %s28, %s29
      %p33 = pneg %p27
      %p34 = scmp.eq.s32.totalorder %s18, 1
      %p35 = por %p33, %p34
      %p36 = scmp.ne.s32.totalorder %s28, %s31
      %p37 = scmp.eq.s32.totalorder %s18, 0
      %p38 = por %p36, %p37
      %p39 = scmp.ne.s32.totalorder %s28, %s31
      %p40 = scmp.eq.s32.totalorder %s23, 1
      %p41 = por %p39, %p40
      %p42 = scmp.ne.s32.totalorder %s31, %s32
      %p43 = scmp.eq.s32.totalorder %s23, 0
      %p44 = por %p42, %p43
      %p45 = scmp.ne.s32.totalorder %s31, %s32
      %p46 = scmp.eq.s32.totalorder %s24, 1
      %p47 = por %p45, %p46
      %p49 = scmp.ne.s32.totalorder %s32, %s48
      %p50 = scmp.eq.s32.totalorder %s24, 0
      %p51 = por %p49, %p50
      %s53 = sadd.s32 %s52, 1
      %p56 = scmp.eq.s32.totalorder %s18, 1
      %p57 = scmp.ne.s32.totalorder %s52, %s54
      %p58 = scmp.eq.s32.totalorder %s18, 0
      %p59 = por %p57, %p58
      %p60 = scmp.ne.s32.totalorder %s52, %s54
      %p61 = scmp.eq.s32.totalorder %s23, 1
      %p62 = por %p60, %p61
      %p63 = scmp.ne.s32.totalorder %s54, %s55
      %p64 = scmp.eq.s32.totalorder %s23, 0
      %p65 = por %p63, %p64
      %p66 = scmp.ne.s32.totalorder %s54, %s55
      %p67 = scmp.eq.s32.totalorder %s24, 1
      %p68 = por %p66, %p67
      %p70 = scmp.ne.s32.totalorder %s55, %s69
      %p71 = scmp.eq.s32.totalorder %s24, 0
      %p72 = por %p70, %p71
      %s74 = sadd.s32 %s73, 1
      %p77 = scmp.eq.s32.totalorder %s18, 1
      %p78 = scmp.ne.s32.totalorder %s73, %s75
      %p79 = scmp.eq.s32.totalorder %s18, 0
      %p80 = por %p78, %p79
      %p81 = scmp.ne.s32.totalorder %s73, %s75
      %p82 = scmp.eq.s32.totalorder %s23, 1
      %p83 = por %p81, %p82
      %p84 = scmp.ne.s32.totalorder %s75, %s76
      %p85 = scmp.eq.s32.totalorder %s23, 0
      %p86 = por %p84, %p85
      %p87 = scmp.ne.s32.totalorder %s75, %s76
      %p88 = scmp.eq.s32.totalorder %s24, 1
      %p89 = por %p87, %p88
      %p91 = scmp.ne.s32.totalorder %s76, %s90
      %p92 = scmp.eq.s32.totalorder %s24, 0
      %p93 = por %p91, %p92
      %s94 = ssub.s32 %s18, %s25
      %p95 = scmp.eq.s32.totalorder %s94, 0
      %s97 = sadd.s32 %s96, 1
      %s98 = scalar_select %p95, %s96, %s97
      %p101 = pneg %p95
      %p102 = scmp.eq.s32.totalorder %s18, 1
      %p103 = por %p101, %p102
      %p104 = scmp.ne.s32.totalorder %s96, %s99
      %p105 = scmp.eq.s32.totalorder %s18, 0
      %p106 = por %p104, %p105
      %p107 = scmp.ne.s32.totalorder %s96, %s99
      %p108 = scmp.eq.s32.totalorder %s23, 1
      %p109 = por %p107, %p108
      %p110 = scmp.ne.s32.totalorder %s99, %s100
      %p111 = scmp.eq.s32.totalorder %s23, 0
      %p112 = por %p110, %p111
      %p113 = scmp.ne.s32.totalorder %s99, %s100
      %p114 = scmp.eq.s32.totalorder %s24, 1
      %p115 = por %p113, %p114
      %p117 = scmp.ne.s32.totalorder %s100, %s116
      %p118 = scmp.eq.s32.totalorder %s24, 0
      %p119 = por %p117, %p118
      %s120 = ssub.s32 %s18, %s25
      %p121 = scmp.eq.s32.totalorder %s120, 0
      %s123 = sadd.s32 %s122, 1
      %s124 = scalar_select %p121, %s122, %s123
      %p127 = pneg %p121
      %p128 = scmp.eq.s32.totalorder %s18, 1
      %p129 = por %p127, %p128
      %p130 = scmp.ne.s32.totalorder %s122, %s125
      %p131 = scmp.eq.s32.totalorder %s18, 0
      %p132 = por %p130, %p131
      %p133 = scmp.ne.s32.totalorder %s122, %s125
      %p134 = scmp.eq.s32.totalorder %s23, 1
      %p135 = por %p133, %p134
      %p136 = scmp.ne.s32.totalorder %s125, %s126
      %p137 = scmp.eq.s32.totalorder %s23, 0
      %p138 = por %p136, %p137
      %p139 = scmp.ne.s32.totalorder %s125, %s126
      %p140 = scmp.eq.s32.totalorder %s24, 1
      %p141 = por %p139, %p140
      %p143 = scmp.ne.s32.totalorder %s126, %s142
      %p144 = scmp.eq.s32.totalorder %s24, 0
      %p145 = por %p143, %p144
      %s146 = ssub.s32 %s18, %s25
      %p147 = scmp.eq.s32.totalorder %s146, 0
      %s149 = sadd.s32 %s148, 1
      %s150 = scalar_select %p147, %s148, %s149
      %p153 = pneg %p147
      %p154 = scmp.eq.s32.totalorder %s18, 1
      %p155 = por %p153, %p154
      %p156 = scmp.ne.s32.totalorder %s148, %s151
      %p157 = scmp.eq.s32.totalorder %s18, 0
      %p158 = por %p156, %p157
      %p159 = scmp.ne.s32.totalorder %s148, %s151
      %p160 = scmp.eq.s32.totalorder %s23, 1
      %p161 = por %p159, %p160
      %p162 = scmp.ne.s32.totalorder %s151, %s152
      %p163 = scmp.eq.s32.totalorder %s23, 0
      %p164 = por %p162, %p163
      %p165 = scmp.ne.s32.totalorder %s151, %s152
      %p166 = scmp.eq.s32.totalorder %s24, 1
      %p167 = por %p165, %p166
      %p169 = scmp.ne.s32.totalorder %s152, %s168
      %p170 = scmp.eq.s32.totalorder %s24, 0
      %p171 = por %p169, %p170
      %p172 = scmp.le.s32.totalorder 1, %s18
      %p173 = scmp.lt.s32.totalorder %s18, 3
      %p174 = pnand %p172, %p173
      %p175 = pneg %p174
      // Predicated region
      $region9: #{tpu_custom_call.1} parent=5 // pred_check
        _
      $region10: #{tpu_custom_call.1} parent=5 // pred_check_branch
        %177 = sbr.rel (%p174) target = $region12
      $region11: #{tpu_custom_call.1} parent=5 // pred_region
        %s178 = ssub.s32 %s18, 1
        // Predicated region
        $region13: #{tpu_custom_call.1} parent=11 // pred_check
          %p179 = pneg %p65
        $region14: #{tpu_custom_call.1} parent=11 // pred_check_branch
          %181 = sbr.rel (%p179) target = $region16
        $region15: #{tpu_custom_call.1} parent=11 // pred_region
          %s183 = ssub.s32 2048, 2048
          %184 = vsyncadd [#allocation3], %s183
          %s185 = sshll.u32 [#allocation2], 4
          %s186 = int_to_ptr.vmem [resolvable:$true] %s185
          %191 = dma.hbm_to_vmem [thread:$0]  %s1, 2048, %s186, [#allocation3], 128, 128, 8
        $region16: #{tpu_custom_call.1} parent=11 // pred_fallthru
          _
        // Predicated region
        $region17: #{tpu_custom_call.1} parent=11 // pred_check
          %p192 = pneg %p86
        $region18: #{tpu_custom_call.1} parent=11 // pred_check_branch
          %194 = sbr.rel (%p192) target = $region20
        $region19: #{tpu_custom_call.1} parent=11 // pred_region
          _
        $region20: #{tpu_custom_call.1} parent=11 // pred_fallthru
          _
      $region12: #{tpu_custom_call.1} parent=5 // pred_fallthru
        _
      %p195 = scmp.lt.s32.totalorder %s18, 2
      // Predicated region
      $region21: #{tpu_custom_call.1} parent=5 // pred_check
        %p196 = pneg %p195
      $region22: #{tpu_custom_call.1} parent=5 // pred_check_branch
        %198 = sbr.rel (%p196) target = $region24
      $region23: #{tpu_custom_call.1} parent=5 // pred_region
        // Predicated region
        $region25: #{tpu_custom_call.1} parent=23 // pred_check
          %p199 = pneg %p38
        $region26: #{tpu_custom_call.1} parent=23 // pred_check_branch
          %201 = sbr.rel (%p199) target = $region28
        $region27: #{tpu_custom_call.1} parent=23 // pred_region
          %p202 = scmp.lt.s32.totalorder %s18, 1
          %s203 = scalar_select %p202, %s18, 1
          %s204 = smul.addr %s203, 8
          %s205 = scalar_lea.vmem %s0, %s204
        $region28: #{tpu_custom_call.1} parent=23 // pred_fallthru
          _
        // Predicated region
        $region29: #{tpu_custom_call.1} parent=23 // pred_check
          %p206 = pneg %p106
        $region30: #{tpu_custom_call.1} parent=23 // pred_check_branch
          %208 = sbr.rel (%p206) target = $region32
        $region31: #{tpu_custom_call.1} parent=23 // pred_region
          %s209 = sand.u32 %s96, 1
          %s210 = scalar_lea.sflag [#allocation6], %s209
          %s211 = sand.u32 %s96, 1
          %s212 = smul.addr %s211, 128
          %s213 = scalar_lea.vmem [#allocation5], %s212
          %s214 = smul.u32 8, %s18
          %s216 = ssub.s32 2048, 2048
          %217 = vsyncadd %s210, %s216
          %s218 = smul.addr %s214, 2
          %s219 = smul.addr %s218, 128
          %s220 = scalar_lea.hbm %s3, %s219
          %s221 = sshll.u32 %s213, 4
          %s222 = int_to_ptr.vmem [resolvable:$true] %s221
          %227 = dma.hbm_to_vmem [thread:$0]  %s220, 2048, %s222, %s210, 128, 128, 8
        $region32: #{tpu_custom_call.1} parent=23 // pred_fallthru
          _
        // Predicated region
        $region33: #{tpu_custom_call.1} parent=23 // pred_check
          %p228 = pneg %p132
        $region34: #{tpu_custom_call.1} parent=23 // pred_check_branch
          %230 = sbr.rel (%p228) target = $region36
        $region35: #{tpu_custom_call.1} parent=23 // pred_region
          %p231 = scmp.lt.s32.totalorder %s18, 1
          %s232 = scalar_select %p231, %s18, 1
          %s233 = smul.addr %s232, 8
          %s234 = scalar_lea.vmem %s4, %s233
        $region36: #{tpu_custom_call.1} parent=23 // pred_fallthru
          _
      $region24: #{tpu_custom_call.1} parent=5 // pred_fallthru
        _
      %p235 = scmp.le.s32.totalorder 1, %s18
      %p236 = scmp.lt.s32.totalorder %s18, 3
      %p237 = pnand %p235, %p236
      %p238 = pneg %p237
      // Predicated region
      $region37: #{tpu_custom_call.1} parent=5 // pred_check
        _
      $region38: #{tpu_custom_call.1} parent=5 // pred_check_branch
        %240 = sbr.rel (%p237) target = $region40
      $region39: #{tpu_custom_call.1} parent=5 // pred_region
        %s241 = ssub.s32 %s18, 1
        // Predicated region
        $region41: #{tpu_custom_call.1} parent=39 // pred_check
          %p242 = pneg %p65
        $region42: #{tpu_custom_call.1} parent=39 // pred_check_branch
          %244 = sbr.rel (%p242) target = $region44
        $region43: #{tpu_custom_call.1} parent=39 // pred_region
          %245 = dma.done [#allocation3], 2048
        $region44: #{tpu_custom_call.1} parent=39 // pred_fallthru
          _
        %s246 = sand.u32 %s99, 1
        %s247 = scalar_lea.sflag [#allocation6], %s246
        %s248 = sand.u32 %s99, 1
        %s249 = smul.addr %s248, 128
        %s250 = scalar_lea.vmem [#allocation5], %s249
        // Predicated region
        $region45: #{tpu_custom_call.1} parent=39 // pred_check
          %p251 = pneg %p112
        $region46: #{tpu_custom_call.1} parent=39 // pred_check_branch
          %253 = sbr.rel (%p251) target = $region48
        $region47: #{tpu_custom_call.1} parent=39 // pred_region
          %254 = dma.done %s247, 2048
        $region48: #{tpu_custom_call.1} parent=39 // pred_fallthru
          _
        %p255 = scmp.lt.s32.totalorder %s23, 1
        %s256 = scalar_select %p255, %s23, 1
        %s257 = smul.addr %s256, 8
        %s258 = scalar_lea.vmem %s0, %s257
        %p259 = pneg %p44
        %p260 = pneg %p41
        %p261 = pneg %p65
        %p262 = pneg %p62
        %p263 = pneg %p86
        %p264 = pneg %p83
        %s265 = sand.u32 %s99, 1
        %s266 = scalar_lea.sflag [#allocation6], %s265
        %s267 = sand.u32 %s99, 1
        %s268 = smul.addr %s267, 128
        %s269 = scalar_lea.vmem [#allocation5], %s268
        %p270 = pneg %p112
        %p271 = pneg %p109
        %p272 = scmp.lt.s32.totalorder %s23, 1
        %s273 = scalar_select %p272, %s23, 1
        %s274 = smul.addr %s273, 8
        %s275 = scalar_lea.vmem %s4, %s274
        %p276 = pneg %p138
        %p277 = pneg %p135
        %p278 = pneg %p164
        %p279 = pneg %p161
        %s280 = sand.u32 %s151, 1
        %s281 = scalar_lea.sflag [#allocation4], %s280
        %s282 = sand.u32 %s151, 1
        %s283 = smul.addr %s282, 8
        %s284 = scalar_lea.vmem [#allocation7], %s283
        %p285 = scmp.lt.s32.totalorder %s23, 1
        %s286 = scalar_select %p285, %s23, 1
        %s287 = smul.addr %s286, 8
        %s288 = scalar_lea.vmem %s0, %s287
        %s289 = smul.u32 8, %s23
        %p290 = scmp.lt.s32.totalorder %s23, 1
        %s291 = scalar_select %p290, %s23, 1
        %s292 = smul.addr %s291, 8
        %s293 = scalar_lea.vmem %s4, %s292
        %v294 = vld [vmem:[%s288] sm:$0xff]
        %v295 = vld [vmem:[#allocation2] sm:$0xff]
        %v296 = vld [vmem:[#allocation2 + $0x8] sm:$0xff]
        %v297 = vld [vmem:[#allocation2 + $0x10] sm:$0xff]
        %v298 = vld [vmem:[#allocation2 + $0x18] sm:$0xff]
        %v299 = vld [vmem:[#allocation2 + $0x20] sm:$0xff]
        %v300 = vld [vmem:[#allocation2 + $0x28] sm:$0xff]
        %v301 = vld [vmem:[#allocation2 + $0x30] sm:$0xff]
        %v302 = vld [vmem:[#allocation2 + $0x38] sm:$0xff]
        %v303 = vld [vmem:[#allocation2 + $0x40] sm:$0xff]
        %v304 = vld [vmem:[#allocation2 + $0x48] sm:$0xff]
        %v305 = vld [vmem:[#allocation2 + $0x50] sm:$0xff]
        %v306 = vld [vmem:[#allocation2 + $0x58] sm:$0xff]
        %v307 = vld [vmem:[#allocation2 + $0x60] sm:$0xff]
        %v308 = vld [vmem:[#allocation2 + $0x68] sm:$0xff]
        %v309 = vld [vmem:[#allocation2 + $0x70] sm:$0xff]
        %v310 = vld [vmem:[#allocation2 + $0x78] sm:$0xff]
        %v311 = vld [vmem:[%s2] sm:$0x1]
        %v313 = vlaneseq
        %v314 = vshrl.u32 %v313, 7
        %v315 = vsub.s32 0, %v314
        %v316 = vrot.slane %v311, %v315
        %318 = vmatprep.subr.mxu0 0.0
        %319 = vmatpush1.msra.mxu0 %v295
        %320 = vmatprep.subr.mxu0 0.0
        %321 = vmatpush1.msra.mxu0 %v296
        %322 = vmatprep.subr.mxu0 0.0
        %323 = vmatpush1.msra.mxu0 %v297
        %324 = vmatprep.subr.mxu0 0.0
        %325 = vmatpush1.msra.mxu0 %v298
        %326 = vmatprep.subr.mxu0 0.0
        %327 = vmatpush1.msra.mxu0 %v299
        %328 = vmatprep.subr.mxu0 0.0
        %329 = vmatpush1.msra.mxu0 %v300
        %330 = vmatprep.subr.mxu0 0.0
        %331 = vmatpush1.msra.mxu0 %v301
        %332 = vmatprep.subr.mxu0 0.0
        %333 = vmatpush1.msra.mxu0 %v302
        %334 = vmatprep.subr.mxu0 0.0
        %335 = vmatpush1.msra.mxu0 %v303
        %336 = vmatprep.subr.mxu0 0.0
        %337 = vmatpush1.msra.mxu0 %v304
        %338 = vmatprep.subr.mxu0 0.0
        %339 = vmatpush1.msra.mxu0 %v305
        %340 = vmatprep.subr.mxu0 0.0
        %341 = vmatpush1.msra.mxu0 %v306
        %342 = vmatprep.subr.mxu0 0.0
        %343 = vmatpush1.msra.mxu0 %v307
        %344 = vmatprep.subr.mxu0 0.0
        %345 = vmatpush1.msra.mxu0 %v308
        %346 = vmatprep.subr.mxu0 0.0
        %347 = vmatpush1.msra.mxu0 %v309
        %348 = vmatprep.subr.mxu0 0.0
        %349 = vmatpush1.msra.mxu0 %v310
        %350 = vmatprep.subr.mxu0 0.0
        %351 = vmatpush1.msra.mxu0 0.0
        %352 = vmatprep.subr.mxu0 0.0
        %353 = vmatpush1.msra.mxu0 0.0
        %354 = vmatprep.subr.mxu0 0.0
        %355 = vmatpush1.msra.mxu0 0.0
        %356 = vmatprep.subr.mxu0 0.0
        %357 = vmatpush1.msra.mxu0 0.0
        %358 = vmatprep.subr.mxu0 0.0
        %359 = vmatpush1.msra.mxu0 0.0
        %360 = vmatprep.subr.mxu0 0.0
        %361 = vmatpush1.msra.mxu0 0.0
        %362 = vmatprep.subr.mxu0 0.0
        %363 = vmatpush1.msra.mxu0 0.0
        %364 = vmatprep.subr.mxu0 0.0
        %365 = vmatpush1.msra.mxu0 0.0
        %366 = vmatprep.subr.mxu0 0.0
        %367 = vmatpush1.msra.mxu0 0.0
        %368 = vmatprep.subr.mxu0 0.0
        %369 = vmatpush1.msra.mxu0 0.0
        %370 = vmatprep.subr.mxu0 0.0
        %371 = vmatpush1.msra.mxu0 0.0
        %372 = vmatprep.subr.mxu0 0.0
        %373 = vmatpush1.msra.mxu0 0.0
        %374 = vmatprep.subr.mxu0 0.0
        %375 = vmatpush1.msra.mxu0 0.0
        %376 = vmatprep.subr.mxu0 0.0
        %377 = vmatpush1.msra.mxu0 0.0
        %378 = vmatprep.subr.mxu0 0.0
        %379 = vmatpush1.msra.mxu0 0.0
        %380 = vmatprep.subr.mxu0 0.0
        %381 = vmatpush1.msra.mxu0 0.0
        %382 = vmatprep.mubr.f32.mxu0 0.0
        %383 = vmatmul.mubr.f32.gmra.mrb[0].mxu0 %v294
        %v384 = vpop.f32.mrb[0].mxu0
        %v385 = vadd.f32 %v316, %v384
        %v386 = vpop.f32.mrb[0].mxu0
        %387 = vdwg.mxu0
        %v389 = vcombine.high %v385, %v385
        %v391 = vunpack.c.l.s4 1966171168
        %v392 = vunpack.c.0.s8 %v391
        %v393 = vlaneseq
        %v394 = vshrl.u32 %v393, 7
        %v395 = vsub.s32 %v392, %v394
        %v396 = vrot.slane %v385, %v395
        %v398 = vunpack.c.l.s4 1966171168
        %v399 = vunpack.c.0.s8 %v398
        %v400 = vlaneseq
        %v401 = vshrl.u32 %v400, 7
        %v402 = vsub.s32 %v399, %v401
        %v403 = vrot.slane %v389, %v402
        %v404 = vcombine.high %v396, %v396
        %v405 = vcombine.high %v403, %v403
        %v407 = vunpack.c.l.s4 1966171168
        %v408 = vunpack.c.0.s8 %v407
        %v409 = vlaneseq
        %v410 = vshrl.u32 %v409, 7
        %v411 = vsub.s32 %v408, %v410
        %v412 = vrot.slane %v396, %v411
        %v414 = vunpack.c.l.s4 1966171168
        %v415 = vunpack.c.0.s8 %v414
        %v416 = vlaneseq
        %v417 = vshrl.u32 %v416, 7
        %v418 = vsub.s32 %v415, %v417
        %v419 = vrot.slane %v403, %v418
        %v421 = vunpack.c.l.s4 1966171168
        %v422 = vunpack.c.0.s8 %v421
        %v423 = vlaneseq
        %v424 = vshrl.u32 %v423, 7
        %v425 = vsub.s32 %v422, %v424
        %v426 = vrot.slane %v404, %v425
        %v428 = vunpack.c.l.s4 1966171168
        %v429 = vunpack.c.0.s8 %v428
        %v430 = vlaneseq
        %v431 = vshrl.u32 %v430, 7
        %v432 = vsub.s32 %v429, %v431
        %v433 = vrot.slane %v405, %v432
        %v434 = vcombine.high %v412, %v412
        %v435 = vcombine.high %v419, %v419
        %v436 = vcombine.high %v426, %v426
        %v437 = vcombine.high %v433, %v433
        %v438 = vld [vmem:[%s250] sm:$0xff]
        %v439 = vld [vmem:[%s250 + $0x10] sm:$0xff]
        %v440 = vld [vmem:[%s250 + $0x20] sm:$0xff]
        %v441 = vld [vmem:[%s250 + $0x30] sm:$0xff]
        %v442 = vld [vmem:[%s250 + $0x40] sm:$0xff]
        %v443 = vld [vmem:[%s250 + $0x50] sm:$0xff]
        %v444 = vld [vmem:[%s250 + $0x60] sm:$0xff]
        %v445 = vld [vmem:[%s250 + $0x70] sm:$0xff]
        %v446 = vlaneseq
        %v447 = vshrl.u32 %v446, 7
        %v448 = vsub.s32 0, %v447
        %v449 = vrot.slane %v412, %v448
        %v450 = vlaneseq
        %v451 = vshrl.u32 %v450, 7
        %v452 = vsub.s32 0, %v451
        %v453 = vrot.slane %v426, %v452
        %v454 = vlaneseq
        %v455 = vshrl.u32 %v454, 7
        %v456 = vsub.s32 0, %v455
        %v457 = vrot.slane %v434, %v456
        %v458 = vlaneseq
        %v459 = vshrl.u32 %v458, 7
        %v460 = vsub.s32 0, %v459
        %v461 = vrot.slane %v436, %v460
        %v462 = vlaneseq
        %v463 = vshrl.u32 %v462, 7
        %v464 = vsub.s32 0, %v463
        %v465 = vrot.slane %v419, %v464
        %v466 = vlaneseq
        %v467 = vshrl.u32 %v466, 7
        %v468 = vsub.s32 0, %v467
        %v469 = vrot.slane %v433, %v468
        %v470 = vlaneseq
        %v471 = vshrl.u32 %v470, 7
        %v472 = vsub.s32 0, %v471
        %v473 = vrot.slane %v435, %v472
        %v474 = vlaneseq
        %v475 = vshrl.u32 %v474, 7
        %v476 = vsub.s32 0, %v475
        %v477 = vrot.slane %v437, %v476
        %v486 = vmul.f32 %v449, %v438
        %v487 = vmul.f32 %v453, %v439
        %v488 = vmul.f32 %v457, %v440
        %v489 = vmul.f32 %v461, %v441
        %v490 = vmul.f32 %v465, %v442
        %v491 = vmul.f32 %v469, %v443
        %v492 = vmul.f32 %v473, %v444
        %v493 = vmul.f32 %v477, %v445
        %494 = vadd.xlane.f32.xlu0 %v486
        %v495 = vpop.xlane.xlu0 %494
        %496 = vadd.xlane.f32.xlu0 %v487
        %v497 = vpop.xlane.xlu0 %496
        %498 = vadd.xlane.f32.xlu0 %v488
        %v499 = vpop.xlane.xlu0 %498
        %500 = vadd.xlane.f32.xlu0 %v489
        %v501 = vpop.xlane.xlu0 %500
        %502 = vadd.xlane.f32.xlu0 %v490
        %v503 = vpop.xlane.xlu0 %502
        %504 = vadd.xlane.f32.xlu0 %v491
        %v505 = vpop.xlane.xlu0 %504
        %506 = vadd.xlane.f32.xlu0 %v492
        %v507 = vpop.xlane.xlu0 %506
        %508 = vadd.xlane.f32.xlu0 %v493
        %v509 = vpop.xlane.xlu0 %508
        %v510 = vld [vmem:[%s250 + $0x8] sm:$0xff]
        %v511 = vld [vmem:[%s250 + $0x18] sm:$0xff]
        %v512 = vld [vmem:[%s250 + $0x28] sm:$0xff]
        %v513 = vld [vmem:[%s250 + $0x38] sm:$0xff]
        %v514 = vld [vmem:[%s250 + $0x48] sm:$0xff]
        %v515 = vld [vmem:[%s250 + $0x58] sm:$0xff]
        %v516 = vld [vmem:[%s250 + $0x68] sm:$0xff]
        %v517 = vld [vmem:[%s250 + $0x78] sm:$0xff]
        %v518 = vmul.f32 %v449, %v510
        %v519 = vmul.f32 %v453, %v511
        %v520 = vmul.f32 %v457, %v512
        %v521 = vmul.f32 %v461, %v513
        %v522 = vmul.f32 %v465, %v514
        %v523 = vmul.f32 %v469, %v515
        %v524 = vmul.f32 %v473, %v516
        %v525 = vmul.f32 %v477, %v517
        %526 = vadd.xlane.f32.xlu0 %v518
        %v527 = vpop.xlane.xlu0 %526
        %528 = vadd.xlane.f32.xlu0 %v519
        %v529 = vpop.xlane.xlu0 %528
        %530 = vadd.xlane.f32.xlu0 %v520
        %v531 = vpop.xlane.xlu0 %530
        %532 = vadd.xlane.f32.xlu0 %v521
        %v533 = vpop.xlane.xlu0 %532
        %534 = vadd.xlane.f32.xlu0 %v522
        %v535 = vpop.xlane.xlu0 %534
        %536 = vadd.xlane.f32.xlu0 %v523
        %v537 = vpop.xlane.xlu0 %536
        %538 = vadd.xlane.f32.xlu0 %v524
        %v539 = vpop.xlane.xlu0 %538
        %540 = vadd.xlane.f32.xlu0 %v525
        %v541 = vpop.xlane.xlu0 %540
        %v550 = vlaneseq
        %v551 = vand.u32 %v550, 127
        %v552 = vlaneseq
        %v553 = vshrl.u32 %v552, 7
        %v554 = vsub.s32 %v551, %v553
        %v555 = vrot.slane %v495, %v554
        %v556 = vlaneseq
        %v557 = vshrl.u32 %v556, 7
        %v558 = vsub.s32 %v551, %v557
        %v559 = vrot.slane %v497, %v558
        %v560 = vlaneseq
        %v561 = vshrl.u32 %v560, 7
        %v562 = vsub.s32 %v551, %v561
        %v563 = vrot.slane %v499, %v562
        %v564 = vlaneseq
        %v565 = vshrl.u32 %v564, 7
        %v566 = vsub.s32 %v551, %v565
        %v567 = vrot.slane %v501, %v566
        %v568 = vlaneseq
        %v569 = vshrl.u32 %v568, 7
        %v570 = vsub.s32 %v551, %v569
        %v571 = vrot.slane %v503, %v570
        %v572 = vlaneseq
        %v573 = vshrl.u32 %v572, 7
        %v574 = vsub.s32 %v551, %v573
        %v575 = vrot.slane %v505, %v574
        %v576 = vlaneseq
        %v577 = vshrl.u32 %v576, 7
        %v578 = vsub.s32 %v551, %v577
        %v579 = vrot.slane %v507, %v578
        %v580 = vlaneseq
        %v581 = vshrl.u32 %v580, 7
        %v582 = vsub.s32 %v551, %v581
        %v583 = vrot.slane %v509, %v582
        %vm584 = vcmask 1041409
        %v585 = vsel %vm584, %v559, %v555
        %vm586 = vcmask 1042434
        %v587 = vsel %vm586, %v563, %v585
        %vm588 = vcmask 1043459
        %v589 = vsel %vm588, %v567, %v587
        %vm590 = vcmask 1044484
        %v591 = vsel %vm590, %v571, %v589
        %vm592 = vcmask 1045509
        %v593 = vsel %vm592, %v575, %v591
        %vm594 = vcmask 1046534
        %v595 = vsel %vm594, %v579, %v593
        %vm596 = vcmask 1047559
        %v597 = vsel %vm596, %v583, %v595
        %v607 = vadd.s32 %v551, 4294967288
        %v608 = vlaneseq
        %v609 = vshrl.u32 %v608, 7
        %v610 = vsub.s32 %v607, %v609
        %v611 = vrot.slane %v527, %v610
        %v612 = vlaneseq
        %v613 = vshrl.u32 %v612, 7
        %v614 = vsub.s32 %v607, %v613
        %v615 = vrot.slane %v529, %v614
        %v616 = vlaneseq
        %v617 = vshrl.u32 %v616, 7
        %v618 = vsub.s32 %v607, %v617
        %v619 = vrot.slane %v531, %v618
        %v620 = vlaneseq
        %v621 = vshrl.u32 %v620, 7
        %v622 = vsub.s32 %v607, %v621
        %v623 = vrot.slane %v533, %v622
        %v624 = vlaneseq
        %v625 = vshrl.u32 %v624, 7
        %v626 = vsub.s32 %v607, %v625
        %v627 = vrot.slane %v535, %v626
        %v628 = vlaneseq
        %v629 = vshrl.u32 %v628, 7
        %v630 = vsub.s32 %v607, %v629
        %v631 = vrot.slane %v537, %v630
        %v632 = vlaneseq
        %v633 = vshrl.u32 %v632, 7
        %v634 = vsub.s32 %v607, %v633
        %v635 = vrot.slane %v539, %v634
        %v636 = vlaneseq
        %v637 = vshrl.u32 %v636, 7
        %v638 = vsub.s32 %v607, %v637
        %v639 = vrot.slane %v541, %v638
        %v640 = vsel %vm584, %v615, %v611
        %v641 = vsel %vm586, %v619, %v640
        %v642 = vsel %vm588, %v623, %v641
        %v643 = vsel %vm590, %v627, %v642
        %v644 = vsel %vm592, %v631, %v643
        %v645 = vsel %vm594, %v635, %v644
        %v646 = vsel %vm596, %v639, %v645
        %vm648 = vcmask 64512
        %v649 = vsel %vm648, %v597, %v646
        %v650 = vld [vmem:[%s293] sm:$0xff]
        %651 = vset.pattern.permute.xlu0 0
        %652 = vperm.xlu0 %651, %v650
        %v653 = vpop.permute.xlu0 %652
        %vm654 = vcmp.lt.s32.totalorder %v551, %v653
        %v655 = vsel %vm654, %v649, -1e+30
        %vm656 = vcmask 130048
        %v657 = vsel %vm656, %v655, -inf
        %658 = vmax.xlane.f32.xlu0 %v657
        %v659 = vpop.xlane.xlu0 %658
        %v660 = vsub.f32 %v655, %v659
        %v661 = vmul.f32 %v660, 1.442695
        %v662 = vpow.pop %v661
        %v663 = vsel %vm656, %v662, 0.0
        %664 = vadd.xlane.f32.xlu0 %v663
        %v665 = vpop.xlane.xlu0 %664
        %v666 = vrcp.pop %v665
        %v667 = vmul.f32 %v662, %v666
        %vm668 = vcmp.gt.s32.totalorder %v650, 0
        %v669 = vsel %vm668, 1, 0
        %670 = vset.pattern.permute.xlu0 0
        %671 = vperm.xlu0 %670, %v669
        %v672 = vpop.permute.xlu0 %671
        %vm673 = vcmp.eq.s32.totalorder %v672, 1
        %v674 = vsel %vm673, %v667, 0.0
        %v675 = vlaneseq
        %v676 = vshrl.u32 %v675, 7
        %v677 = vsub.s32 0, %v676
        %v678 = vrot.slane %v674, %v677
        %680 = vbcast.lane.b32.xlu0 %v678, 256
        %v681 = vpop.permute.xlu0 %680
        %v682 = vlaneseq
        %v683 = vshrl.u32 %v682, 7
        %v684 = vsub.s32 1, %v683
        %v685 = vrot.slane %v674, %v684
        %687 = vbcast.lane.b32.xlu0 %v685, 256
        %v688 = vpop.permute.xlu0 %687
        %v689 = vlaneseq
        %v690 = vshrl.u32 %v689, 7
        %v691 = vsub.s32 2, %v690
        %v692 = vrot.slane %v674, %v691
        %694 = vbcast.lane.b32.xlu0 %v692, 256
        %v695 = vpop.permute.xlu0 %694
        %v696 = vlaneseq
        %v697 = vshrl.u32 %v696, 7
        %v698 = vsub.s32 3, %v697
        %v699 = vrot.slane %v674, %v698
        %701 = vbcast.lane.b32.xlu0 %v699, 256
        %v702 = vpop.permute.xlu0 %701
        %v703 = vlaneseq
        %v704 = vshrl.u32 %v703, 7
        %v705 = vsub.s32 4, %v704
        %v706 = vrot.slane %v674, %v705
        %708 = vbcast.lane.b32.xlu0 %v706, 256
        %v709 = vpop.permute.xlu0 %708
        %v710 = vlaneseq
        %v711 = vshrl.u32 %v710, 7
        %v712 = vsub.s32 5, %v711
        %v713 = vrot.slane %v674, %v712
        %715 = vbcast.lane.b32.xlu0 %v713, 256
        %v716 = vpop.permute.xlu0 %715
        %v717 = vlaneseq
        %v718 = vshrl.u32 %v717, 7
        %v719 = vsub.s32 6, %v718
        %v720 = vrot.slane %v674, %v719
        %722 = vbcast.lane.b32.xlu0 %v720, 256
        %v723 = vpop.permute.xlu0 %722
        %v724 = vlaneseq
        %v725 = vshrl.u32 %v724, 7
        %v726 = vsub.s32 7, %v725
        %v727 = vrot.slane %v674, %v726
        %729 = vbcast.lane.b32.xlu0 %v727, 256
        %v730 = vpop.permute.xlu0 %729
        %v731 = vmul.f32 %v681, %v438
        %v732 = vmul.f32 %v688, %v439
        %v733 = vmul.f32 %v695, %v440
        %v734 = vmul.f32 %v702, %v441
        %v735 = vmul.f32 %v709, %v442
        %v736 = vmul.f32 %v716, %v443
        %v737 = vmul.f32 %v723, %v444
        %v738 = vmul.f32 %v730, %v445
        %v739 = vrot.slane %v731, 4
        %v740 = vadd.f32 %v731, %v739
        %v741 = vrot.slane %v740, 2
        %v742 = vadd.f32 %v740, %v741
        %v743 = vrot.slane %v742, 1
        %v744 = vadd.f32 %v742, %v743
        %v745 = vrot.slane %v732, 4
        %v746 = vadd.f32 %v732, %v745
        %v747 = vrot.slane %v746, 2
        %v748 = vadd.f32 %v746, %v747
        %v749 = vrot.slane %v748, 1
        %v750 = vadd.f32 %v748, %v749
        %v751 = vrot.slane %v733, 4
        %v752 = vadd.f32 %v733, %v751
        %v753 = vrot.slane %v752, 2
        %v754 = vadd.f32 %v752, %v753
        %v755 = vrot.slane %v754, 1
        %v756 = vadd.f32 %v754, %v755
        %v757 = vrot.slane %v734, 4
        %v758 = vadd.f32 %v734, %v757
        %v759 = vrot.slane %v758, 2
        %v760 = vadd.f32 %v758, %v759
        %v761 = vrot.slane %v760, 1
        %v762 = vadd.f32 %v760, %v761
        %v763 = vrot.slane %v735, 4
        %v764 = vadd.f32 %v735, %v763
        %v765 = vrot.slane %v764, 2
        %v766 = vadd.f32 %v764, %v765
        %v767 = vrot.slane %v766, 1
        %v768 = vadd.f32 %v766, %v767
        %v769 = vrot.slane %v736, 4
        %v770 = vadd.f32 %v736, %v769
        %v771 = vrot.slane %v770, 2
        %v772 = vadd.f32 %v770, %v771
        %v773 = vrot.slane %v772, 1
        %v774 = vadd.f32 %v772, %v773
        %v775 = vrot.slane %v737, 4
        %v776 = vadd.f32 %v737, %v775
        %v777 = vrot.slane %v776, 2
        %v778 = vadd.f32 %v776, %v777
        %v779 = vrot.slane %v778, 1
        %v780 = vadd.f32 %v778, %v779
        %v781 = vrot.slane %v738, 4
        %v782 = vadd.f32 %v738, %v781
        %v783 = vrot.slane %v782, 2
        %v784 = vadd.f32 %v782, %v783
        %v785 = vrot.slane %v784, 1
        %v786 = vadd.f32 %v784, %v785
        %v787 = vadd.f32 %v744, 0.0
        %v788 = vadd.f32 %v750, 0.0
        %v789 = vadd.f32 %v756, 0.0
        %v790 = vadd.f32 %v762, 0.0
        %v791 = vadd.f32 %v768, 0.0
        %v792 = vadd.f32 %v774, 0.0
        %v793 = vadd.f32 %v780, 0.0
        %v794 = vadd.f32 %v786, 0.0
        %s796 = sor.u32 256, 8
        %797 = vbcast.lane.b32.xlu0 %v678, %s796
        %v798 = vpop.permute.xlu0 %797
        %s800 = sor.u32 256, 8
        %801 = vbcast.lane.b32.xlu0 %v685, %s800
        %v802 = vpop.permute.xlu0 %801
        %s804 = sor.u32 256, 8
        %805 = vbcast.lane.b32.xlu0 %v692, %s804
        %v806 = vpop.permute.xlu0 %805
        %s808 = sor.u32 256, 8
        %809 = vbcast.lane.b32.xlu0 %v699, %s808
        %v810 = vpop.permute.xlu0 %809
        %s812 = sor.u32 256, 8
        %813 = vbcast.lane.b32.xlu0 %v706, %s812
        %v814 = vpop.permute.xlu0 %813
        %s816 = sor.u32 256, 8
        %817 = vbcast.lane.b32.xlu0 %v713, %s816
        %v818 = vpop.permute.xlu0 %817
        %s820 = sor.u32 256, 8
        %821 = vbcast.lane.b32.xlu0 %v720, %s820
        %v822 = vpop.permute.xlu0 %821
        %s824 = sor.u32 256, 8
        %825 = vbcast.lane.b32.xlu0 %v727, %s824
        %v826 = vpop.permute.xlu0 %825
        %v827 = vmul.f32 %v798, %v510
        %v828 = vmul.f32 %v802, %v511
        %v829 = vmul.f32 %v806, %v512
        %v830 = vmul.f32 %v810, %v513
        %v831 = vmul.f32 %v814, %v514
        %v832 = vmul.f32 %v818, %v515
        %v833 = vmul.f32 %v822, %v516
        %v834 = vmul.f32 %v826, %v517
        %v835 = vrot.slane %v827, 4
        %v836 = vadd.f32 %v827, %v835
        %v837 = vrot.slane %v836, 2
        %v838 = vadd.f32 %v836, %v837
        %v839 = vrot.slane %v838, 1
        %v840 = vadd.f32 %v838, %v839
        %v841 = vrot.slane %v828, 4
        %v842 = vadd.f32 %v828, %v841
        %v843 = vrot.slane %v842, 2
        %v844 = vadd.f32 %v842, %v843
        %v845 = vrot.slane %v844, 1
        %v846 = vadd.f32 %v844, %v845
        %v847 = vrot.slane %v829, 4
        %v848 = vadd.f32 %v829, %v847
        %v849 = vrot.slane %v848, 2
        %v850 = vadd.f32 %v848, %v849
        %v851 = vrot.slane %v850, 1
        %v852 = vadd.f32 %v850, %v851
        %v853 = vrot.slane %v830, 4
        %v854 = vadd.f32 %v830, %v853
        %v855 = vrot.slane %v854, 2
        %v856 = vadd.f32 %v854, %v855
        %v857 = vrot.slane %v856, 1
        %v858 = vadd.f32 %v856, %v857
        %v859 = vrot.slane %v831, 4
        %v860 = vadd.f32 %v831, %v859
        %v861 = vrot.slane %v860, 2
        %v862 = vadd.f32 %v860, %v861
        %v863 = vrot.slane %v862, 1
        %v864 = vadd.f32 %v862, %v863
        %v865 = vrot.slane %v832, 4
        %v866 = vadd.f32 %v832, %v865
        %v867 = vrot.slane %v866, 2
        %v868 = vadd.f32 %v866, %v867
        %v869 = vrot.slane %v868, 1
        %v870 = vadd.f32 %v868, %v869
        %v871 = vrot.slane %v833, 4
        %v872 = vadd.f32 %v833, %v871
        %v873 = vrot.slane %v872, 2
        %v874 = vadd.f32 %v872, %v873
        %v875 = vrot.slane %v874, 1
        %v876 = vadd.f32 %v874, %v875
        %v877 = vrot.slane %v834, 4
        %v878 = vadd.f32 %v834, %v877
        %v879 = vrot.slane %v878, 2
        %v880 = vadd.f32 %v878, %v879
        %v881 = vrot.slane %v880, 1
        %v882 = vadd.f32 %v880, %v881
        %v883 = vadd.f32 %v787, %v840
        %v884 = vadd.f32 %v788, %v846
        %v885 = vadd.f32 %v789, %v852
        %v886 = vadd.f32 %v790, %v858
        %v887 = vadd.f32 %v791, %v864
        %v888 = vadd.f32 %v792, %v870
        %v889 = vadd.f32 %v793, %v876
        %v890 = vadd.f32 %v794, %v882
        %v899 = vsel %vm584, %v884, %v883
        %v900 = vsel %vm586, %v885, %v899
        %v901 = vsel %vm588, %v886, %v900
        %v902 = vsel %vm590, %v887, %v901
        %v903 = vsel %vm592, %v888, %v902
        %v904 = vsel %vm594, %v889, %v903
        %v905 = vsel %vm596, %v890, %v904
        %907 = vst [vmem:[%s284] sm:$0xff] %v905
        %s908 = sand.u32 %s151, 1
        %s909 = scalar_lea.sflag [#allocation4], %s908
        %s910 = sand.u32 %s151, 1
        %s911 = smul.addr %s910, 8
        %s912 = scalar_lea.vmem [#allocation7], %s911
        // Predicated region
        $region49: #{tpu_custom_call.1} parent=39 // pred_check
          %p913 = pneg %p161
        $region50: #{tpu_custom_call.1} parent=39 // pred_check_branch
          %915 = sbr.rel (%p913) target = $region52
        $region51: #{tpu_custom_call.1} parent=39 // pred_region
          %s917 = ssub.s32 128, 128
          %918 = vsyncadd %s909, %s917
          %s919 = smul.addr %s23, 128
          %s920 = scalar_lea.hbm %s5, %s919
          %s922 = sshll.u32 %s912, 4
          %s923 = int_to_ptr.vmem [resolvable:$true] %s922
          %925 = dma.vmem_to_hbm [thread:$0]  %s923, 128, %s920, %s909
        $region52: #{tpu_custom_call.1} parent=39 // pred_fallthru
          _
      $region40: #{tpu_custom_call.1} parent=5 // pred_fallthru
        _
      %p926 = scmp.le.s32.totalorder 2, %s18
      // Predicated region
      $region53: #{tpu_custom_call.1} parent=5 // pred_check
        %p927 = pneg %p926
      $region54: #{tpu_custom_call.1} parent=5 // pred_check_branch
        %929 = sbr.rel (%p927) target = $region56
      $region55: #{tpu_custom_call.1} parent=5 // pred_region
        %s930 = ssub.s32 %s18, 2
        // Predicated region
        $region57: #{tpu_custom_call.1} parent=55 // pred_check
          %p931 = pneg %p167
        $region58: #{tpu_custom_call.1} parent=55 // pred_check_branch
          %933 = sbr.rel (%p931) target = $region60
        $region59: #{tpu_custom_call.1} parent=55 // pred_region
          %s934 = sand.u32 %s152, 1
          %s935 = scalar_lea.sflag [#allocation4], %s934
          %s936 = sand.u32 %s152, 1
          %s937 = smul.addr %s936, 8
          %s938 = scalar_lea.vmem [#allocation7], %s937
          %939 = dma.done %s935, 128
        $region60: #{tpu_custom_call.1} parent=55 // pred_fallthru
          _
      $region56: #{tpu_custom_call.1} parent=5 // pred_fallthru
        _
    $region6: #{tpu_custom_call.1} parent=1 // loop_footer
      %s22 = sadd.s32 1, %s18
    $region7: #{tpu_custom_call.1} parent=1 // loop_footer_branch
      %17 = sbr.rel target = $region3
    $region8: #{tpu_custom_call.1} parent=1 // loop_exit
      _
    %940 = vsyncpa [#allocation3], 1
    %s941 = scalar_lea.sflag [#allocation3], 1
    %942 = vsyncpa %s941, 1
    %943 = vsyncpa [#allocation6], 1
    %s944 = scalar_lea.sflag [#allocation6], 1
    %945 = vsyncpa %s944, 1
    %946 = vsyncpa [#allocation4], 1
    %s947 = scalar_lea.sflag [#allocation4], 1
    %948 = vsyncpa %s947, 1

</llo_original>
